<compile_context>
chip_gen: v6e
topology: v6e:2x2x1
jax: 0.10.0
libtpu: 0.0.40
codegen_flags: <defaults>
</compile_context>

<pallas_src>
import jax
import jax.numpy as jnp
from jax.experimental import pallas as pl
from jax.experimental.pallas import tpu as pltpu


def _round_up(x: int, m: int) -> int:
    return ((x + m - 1) // m) * m


def _make_kernel(tile_t: int):
    def kernel(tok_ref, emb_hbm, pos_ref, out_ref, gat_ref, sem):
        # tok_ref : (B, T_pad) int32 token ids in SMEM (scalar prefetch)
        # emb_hbm : (V, D) token-embedding table, left in HBM (pl.ANY)
        # pos_ref : (TILE_T, D) position-embedding slab for this tile (VMEM)
        # out_ref : (1, TILE_T, D) output block
        # gat_ref : (TILE_T, D) VMEM scratch for the gathered rows
        # sem     : (TILE_T,) DMA semaphores, one per gathered row
        b = pl.program_id(0)
        j = pl.program_id(1)
        t0 = j * tile_t

        # Issue every row-gather DMA before waiting on any, so the tiny row
        # copies overlap each other (issue-bound, not latency-bound).
        for r in range(tile_t):
            tok = tok_ref[b, t0 + r]
            pltpu.make_async_copy(
                emb_hbm.at[pl.ds(tok, 1), :],
                gat_ref.at[pl.ds(r, 1), :],
                sem.at[r],
            ).start()
        for r in range(tile_t):
            pltpu.make_async_copy(
                emb_hbm.at[pl.ds(0, 1), :],   # shape/size only; wait is on sem[r]
                gat_ref.at[pl.ds(r, 1), :],
                sem.at[r],
            ).wait()

        # Fused add over the whole (TILE_T, D) tile, one dense store.
        x = gat_ref[...] + pos_ref[...].astype(gat_ref.dtype)
        out_ref[...] = x.reshape(out_ref.shape).astype(out_ref.dtype)

    return kernel


def clip_embedding(tokens, token_embedding, position_embedding, tile_t=None):
    """tokens: (B, T) integer ids; token_embedding: (V, D); position_embedding: (T, D)."""
    B, T = tokens.shape
    V, D = token_embedding.shape
    assert position_embedding.shape == (T, D)

    out_dtype = token_embedding.dtype

    # Sublane-friendly tile of tokens per grid step (multiple of 8).
    if tile_t is None:
        tile_t = min(32, _round_up(T, 8))
    else:
        tile_t = max(8, _round_up(tile_t, 8))
    T_pad = _round_up(T, tile_t)

    # PyTorch uses int64 ids; int32 is plenty for CLIP vocab sizes. Clamp so a
    # stray id can never address past the embedding table.
    tok = jnp.clip(tokens.astype(jnp.int32), 0, V - 1)
    pos = position_embedding
    if T_pad != T:
        tok = jnp.pad(tok, ((0, 0), (0, T_pad - T)))            # pad with id 0
        pos = jnp.pad(pos, ((0, T_pad - T), (0, 0)))

    grid_spec = pltpu.PrefetchScalarGridSpec(
        num_scalar_prefetch=1,                                   # ids -> SMEM
        grid=(B, T_pad // tile_t),
        in_specs=[
            pl.BlockSpec(memory_space=pl.ANY),                   # table in HBM
            pl.BlockSpec((tile_t, D), lambda b, j, tok: (j, 0)), # pos slab
        ],
        out_specs=pl.BlockSpec((1, tile_t, D), lambda b, j, tok: (b, j, 0)),
        scratch_shapes=[
            pltpu.VMEM((tile_t, D), token_embedding.dtype),
            pltpu.SemaphoreType.DMA((tile_t,)),
        ],
    )

    out = pl.pallas_call(
        _make_kernel(tile_t),
        out_shape=jax.ShapeDtypeStruct((B, T_pad, D), out_dtype),
        grid_spec=grid_spec,
        compiler_params=pltpu.CompilerParams(
            dimension_semantics=("parallel", "parallel"),
        ),
    )(tok, token_embedding, pos)

    if T_pad != T:
        out = out[:, :T, :]
    return out


if __name__ == "__main__":
    # Small shapes consistent with the module: n_vocab=64, n_embd=32, n_tokens=8
    n_vocab, n_embd, n_tokens, batch = 64, 32, 8, 2

    key = jax.random.PRNGKey(0)
    k_tok, k_emb, k_pos = jax.random.split(key, 3)

    # nn.Embedding weight is random; position param is zeros in __init__, but we
    # use small random values to exercise the fused add (semantics unchanged).
    token_embedding = jax.random.normal(k_emb, (n_vocab, n_embd), jnp.float32)
    position_embedding = 0.01 * jax.random.normal(
        k_pos, (n_tokens, n_embd), jnp.float32
    )
    tokens = jax.random.randint(k_tok, (batch, n_tokens), 0, n_vocab, jnp.int32)

    out = clip_embedding(tokens, token_embedding, position_embedding)
    out = jax.block_until_ready(out)

    # Pure-JAX reference check
    ref = token_embedding[tokens] + position_embedding[None, :, :]
    assert out.shape == (batch, n_tokens, n_embd)
    assert jnp.allclose(out, ref, atol=1e-6), "mismatch vs reference"

    print("KERNEL_OK")
</pallas_src>

<mosaic_0001>
module attributes {stable_mosaic.version = 11 : i64} {
  func.func @kernel(%arg0: i32, %arg1: i32, %arg2: memref<2x8xi32, #tpu.memory_space<smem>>, %arg3: memref<64x32xf32, #tpu.memory_space<any>>, %arg4: memref<8x32xf32, #tpu.memory_space<vmem>>, %arg5: memref<1x8x32xf32, #tpu.memory_space<vmem>>, %arg6: memref<8x32xf32, #tpu.memory_space<vmem>>, %arg7: memref<8x!tpu.dma_semaphore, #tpu.memory_space<semaphore_mem>>) attributes {dimension_semantics = [#tpu.dimension_semantics<parallel>, #tpu.dimension_semantics<parallel>], iteration_bounds = array<i64: 2, 1>, scalar_prefetch = 1 : i64, scratch_operands = 2 : i64, tpu.core_type = #tpu.core_type<tc>, window_params = [{}, {transform_indices = @transform_1, window_bounds = array<i64: 8, 32>}, {transform_indices = @transform_2, window_bounds = array<i64: 1, 8, 32>}]} {
    %c8_i32 = arith.constant 8 : i32
    %0 = arith.muli %arg1, %c8_i32 : i32
    %c0_i32 = arith.constant 0 : i32
    %1 = arith.addi %0, %c0_i32 : i32
    %2 = arith.index_cast %arg0 : i32 to index
    %3 = arith.index_cast %1 : i32 to index
    %4 = memref.load %arg2[%2, %3] : memref<2x8xi32, #tpu.memory_space<smem>>
    %c0_i32_0 = arith.constant 0 : i32
    %c0_i32_1 = arith.constant 0 : i32
    %5 = tpu.memref_slice %arg3[%4, %c0_i32_1] : memref<64x32xf32, #tpu.memory_space<any>> -> memref<1x32xf32, #tpu.memory_space<any>>
    %c0_i32_2 = arith.constant 0 : i32
    %c0_i32_3 = arith.constant 0 : i32
    %6 = tpu.memref_slice %arg6[%c0_i32_2, %c0_i32_3] : memref<8x32xf32, #tpu.memory_space<vmem>> -> memref<1x32xf32, #tpu.memory_space<vmem>>
    %7 = tpu.memref_slice %arg7[%c0_i32_0] : memref<8x!tpu.dma_semaphore, #tpu.memory_space<semaphore_mem>> -> memref<1x!tpu.dma_semaphore, #tpu.memory_space<semaphore_mem>>
    %8 = tpu.memref_squeeze %7 : memref<1x!tpu.dma_semaphore, #tpu.memory_space<semaphore_mem>> -> memref<!tpu.dma_semaphore, #tpu.memory_space<semaphore_mem>>
    tpu.enqueue_dma source(%5 : memref<1x32xf32, #tpu.memory_space<any>>) target(%6 : memref<1x32xf32, #tpu.memory_space<vmem>>) target_semaphore(%8 : memref<!tpu.dma_semaphore, #tpu.memory_space<semaphore_mem>>)
    %c1_i32 = arith.constant 1 : i32
    %9 = arith.addi %0, %c1_i32 : i32
    %10 = arith.index_cast %arg0 : i32 to index
    %11 = arith.index_cast %9 : i32 to index
    %12 = memref.load %arg2[%10, %11] : memref<2x8xi32, #tpu.memory_space<smem>>
    %c1_i32_4 = arith.constant 1 : i32
    %c0_i32_5 = arith.constant 0 : i32
    %13 = tpu.memref_slice %arg3[%12, %c0_i32_5] : memref<64x32xf32, #tpu.memory_space<any>> -> memref<1x32xf32, #tpu.memory_space<any>>
    %c1_i32_6 = arith.constant 1 : i32
    %c0_i32_7 = arith.constant 0 : i32
    %14 = tpu.memref_slice %arg6[%c1_i32_6, %c0_i32_7] : memref<8x32xf32, #tpu.memory_space<vmem>> -> memref<1x32xf32, #tpu.memory_space<vmem>>
    %15 = tpu.memref_slice %arg7[%c1_i32_4] : memref<8x!tpu.dma_semaphore, #tpu.memory_space<semaphore_mem>> -> memref<1x!tpu.dma_semaphore, #tpu.memory_space<semaphore_mem>>
    %16 = tpu.memref_squeeze %15 : memref<1x!tpu.dma_semaphore, #tpu.memory_space<semaphore_mem>> -> memref<!tpu.dma_semaphore, #tpu.memory_space<semaphore_mem>>
    tpu.enqueue_dma source(%13 : memref<1x32xf32, #tpu.memory_space<any>>) target(%14 : memref<1x32xf32, #tpu.memory_space<vmem>>) target_semaphore(%16 : memref<!tpu.dma_semaphore, #tpu.memory_space<semaphore_mem>>)
    %c2_i32 = arith.constant 2 : i32
    %17 = arith.addi %0, %c2_i32 : i32
    %18 = arith.index_cast %arg0 : i32 to index
    %19 = arith.index_cast %17 : i32 to index
    %20 = memref.load %arg2[%18, %19] : memref<2x8xi32, #tpu.memory_space<smem>>
    %c2_i32_8 = arith.constant 2 : i32
    %c0_i32_9 = arith.constant 0 : i32
    %21 = tpu.memref_slice %arg3[%20, %c0_i32_9] : memref<64x32xf32, #tpu.memory_space<any>> -> memref<1x32xf32, #tpu.memory_space<any>>
    %c2_i32_10 = arith.constant 2 : i32
    %c0_i32_11 = arith.constant 0 : i32
    %22 = tpu.memref_slice %arg6[%c2_i32_10, %c0_i32_11] : memref<8x32xf32, #tpu.memory_space<vmem>> -> memref<1x32xf32, #tpu.memory_space<vmem>>
    %23 = tpu.memref_slice %arg7[%c2_i32_8] : memref<8x!tpu.dma_semaphore, #tpu.memory_space<semaphore_mem>> -> memref<1x!tpu.dma_semaphore, #tpu.memory_space<semaphore_mem>>
    %24 = tpu.memref_squeeze %23 : memref<1x!tpu.dma_semaphore, #tpu.memory_space<semaphore_mem>> -> memref<!tpu.dma_semaphore, #tpu.memory_space<semaphore_mem>>
    tpu.enqueue_dma source(%21 : memref<1x32xf32, #tpu.memory_space<any>>) target(%22 : memref<1x32xf32, #tpu.memory_space<vmem>>) target_semaphore(%24 : memref<!tpu.dma_semaphore, #tpu.memory_space<semaphore_mem>>)
    %c3_i32 = arith.constant 3 : i32
    %25 = arith.addi %0, %c3_i32 : i32
    %26 = arith.index_cast %arg0 : i32 to index
    %27 = arith.index_cast %25 : i32 to index
    %28 = memref.load %arg2[%26, %27] : memref<2x8xi32, #tpu.memory_space<smem>>
    %c3_i32_12 = arith.constant 3 : i32
    %c0_i32_13 = arith.constant 0 : i32
    %29 = tpu.memref_slice %arg3[%28, %c0_i32_13] : memref<64x32xf32, #tpu.memory_space<any>> -> memref<1x32xf32, #tpu.memory_space<any>>
    %c3_i32_14 = arith.constant 3 : i32
    %c0_i32_15 = arith.constant 0 : i32
    %30 = tpu.memref_slice %arg6[%c3_i32_14, %c0_i32_15] : memref<8x32xf32, #tpu.memory_space<vmem>> -> memref<1x32xf32, #tpu.memory_space<vmem>>
    %31 = tpu.memref_slice %arg7[%c3_i32_12] : memref<8x!tpu.dma_semaphore, #tpu.memory_space<semaphore_mem>> -> memref<1x!tpu.dma_semaphore, #tpu.memory_space<semaphore_mem>>
    %32 = tpu.memref_squeeze %31 : memref<1x!tpu.dma_semaphore, #tpu.memory_space<semaphore_mem>> -> memref<!tpu.dma_semaphore, #tpu.memory_space<semaphore_mem>>
    tpu.enqueue_dma source(%29 : memref<1x32xf32, #tpu.memory_space<any>>) target(%30 : memref<1x32xf32, #tpu.memory_space<vmem>>) target_semaphore(%32 : memref<!tpu.dma_semaphore, #tpu.memory_space<semaphore_mem>>)
    %c4_i32 = arith.constant 4 : i32
    %33 = arith.addi %0, %c4_i32 : i32
    %34 = arith.index_cast %arg0 : i32 to index
    %35 = arith.index_cast %33 : i32 to index
    %36 = memref.load %arg2[%34, %35] : memref<2x8xi32, #tpu.memory_space<smem>>
    %c4_i32_16 = arith.constant 4 : i32
    %c0_i32_17 = arith.constant 0 : i32
    %37 = tpu.memref_slice %arg3[%36, %c0_i32_17] : memref<64x32xf32, #tpu.memory_space<any>> -> memref<1x32xf32, #tpu.memory_space<any>>
    %c4_i32_18 = arith.constant 4 : i32
    %c0_i32_19 = arith.constant 0 : i32
    %38 = tpu.memref_slice %arg6[%c4_i32_18, %c0_i32_19] : memref<8x32xf32, #tpu.memory_space<vmem>> -> memref<1x32xf32, #tpu.memory_space<vmem>>
    %39 = tpu.memref_slice %arg7[%c4_i32_16] : memref<8x!tpu.dma_semaphore, #tpu.memory_space<semaphore_mem>> -> memref<1x!tpu.dma_semaphore, #tpu.memory_space<semaphore_mem>>
    %40 = tpu.memref_squeeze %39 : memref<1x!tpu.dma_semaphore, #tpu.memory_space<semaphore_mem>> -> memref<!tpu.dma_semaphore, #tpu.memory_space<semaphore_mem>>
    tpu.enqueue_dma source(%37 : memref<1x32xf32, #tpu.memory_space<any>>) target(%38 : memref<1x32xf32, #tpu.memory_space<vmem>>) target_semaphore(%40 : memref<!tpu.dma_semaphore, #tpu.memory_space<semaphore_mem>>)
    %c5_i32 = arith.constant 5 : i32
    %41 = arith.addi %0, %c5_i32 : i32
    %42 = arith.index_cast %arg0 : i32 to index
    %43 = arith.index_cast %41 : i32 to index
    %44 = memref.load %arg2[%42, %43] : memref<2x8xi32, #tpu.memory_space<smem>>
    %c5_i32_20 = arith.constant 5 : i32
    %c0_i32_21 = arith.constant 0 : i32
    %45 = tpu.memref_slice %arg3[%44, %c0_i32_21] : memref<64x32xf32, #tpu.memory_space<any>> -> memref<1x32xf32, #tpu.memory_space<any>>
    %c5_i32_22 = arith.constant 5 : i32
    %c0_i32_23 = arith.constant 0 : i32
    %46 = tpu.memref_slice %arg6[%c5_i32_22, %c0_i32_23] : memref<8x32xf32, #tpu.memory_space<vmem>> -> memref<1x32xf32, #tpu.memory_space<vmem>>
    %47 = tpu.memref_slice %arg7[%c5_i32_20] : memref<8x!tpu.dma_semaphore, #tpu.memory_space<semaphore_mem>> -> memref<1x!tpu.dma_semaphore, #tpu.memory_space<semaphore_mem>>
    %48 = tpu.memref_squeeze %47 : memref<1x!tpu.dma_semaphore, #tpu.memory_space<semaphore_mem>> -> memref<!tpu.dma_semaphore, #tpu.memory_space<semaphore_mem>>
    tpu.enqueue_dma source(%45 : memref<1x32xf32, #tpu.memory_space<any>>) target(%46 : memref<1x32xf32, #tpu.memory_space<vmem>>) target_semaphore(%48 : memref<!tpu.dma_semaphore, #tpu.memory_space<semaphore_mem>>)
    %c6_i32 = arith.constant 6 : i32
    %49 = arith.addi %0, %c6_i32 : i32
    %50 = arith.index_cast %arg0 : i32 to index
    %51 = arith.index_cast %49 : i32 to index
    %52 = memref.load %arg2[%50, %51] : memref<2x8xi32, #tpu.memory_space<smem>>
    %c6_i32_24 = arith.constant 6 : i32
    %c0_i32_25 = arith.constant 0 : i32
    %53 = tpu.memref_slice %arg3[%52, %c0_i32_25] : memref<64x32xf32, #tpu.memory_space<any>> -> memref<1x32xf32, #tpu.memory_space<any>>
    %c6_i32_26 = arith.constant 6 : i32
    %c0_i32_27 = arith.constant 0 : i32
    %54 = tpu.memref_slice %arg6[%c6_i32_26, %c0_i32_27] : memref<8x32xf32, #tpu.memory_space<vmem>> -> memref<1x32xf32, #tpu.memory_space<vmem>>
    %55 = tpu.memref_slice %arg7[%c6_i32_24] : memref<8x!tpu.dma_semaphore, #tpu.memory_space<semaphore_mem>> -> memref<1x!tpu.dma_semaphore, #tpu.memory_space<semaphore_mem>>
    %56 = tpu.memref_squeeze %55 : memref<1x!tpu.dma_semaphore, #tpu.memory_space<semaphore_mem>> -> memref<!tpu.dma_semaphore, #tpu.memory_space<semaphore_mem>>
    tpu.enqueue_dma source(%53 : memref<1x32xf32, #tpu.memory_space<any>>) target(%54 : memref<1x32xf32, #tpu.memory_space<vmem>>) target_semaphore(%56 : memref<!tpu.dma_semaphore, #tpu.memory_space<semaphore_mem>>)
    %c7_i32 = arith.constant 7 : i32
    %57 = arith.addi %0, %c7_i32 : i32
    %58 = arith.index_cast %arg0 : i32 to index
    %59 = arith.index_cast %57 : i32 to index
    %60 = memref.load %arg2[%58, %59] : memref<2x8xi32, #tpu.memory_space<smem>>
    %c7_i32_28 = arith.constant 7 : i32
    %c0_i32_29 = arith.constant 0 : i32
    %61 = tpu.memref_slice %arg3[%60, %c0_i32_29] : memref<64x32xf32, #tpu.memory_space<any>> -> memref<1x32xf32, #tpu.memory_space<any>>
    %c7_i32_30 = arith.constant 7 : i32
    %c0_i32_31 = arith.constant 0 : i32
    %62 = tpu.memref_slice %arg6[%c7_i32_30, %c0_i32_31] : memref<8x32xf32, #tpu.memory_space<vmem>> -> memref<1x32xf32, #tpu.memory_space<vmem>>
    %63 = tpu.memref_slice %arg7[%c7_i32_28] : memref<8x!tpu.dma_semaphore, #tpu.memory_space<semaphore_mem>> -> memref<1x!tpu.dma_semaphore, #tpu.memory_space<semaphore_mem>>
    %64 = tpu.memref_squeeze %63 : memref<1x!tpu.dma_semaphore, #tpu.memory_space<semaphore_mem>> -> memref<!tpu.dma_semaphore, #tpu.memory_space<semaphore_mem>>
    tpu.enqueue_dma source(%61 : memref<1x32xf32, #tpu.memory_space<any>>) target(%62 : memref<1x32xf32, #tpu.memory_space<vmem>>) target_semaphore(%64 : memref<!tpu.dma_semaphore, #tpu.memory_space<semaphore_mem>>)
    %c0_i32_32 = arith.constant 0 : i32
    %c0_i32_33 = arith.constant 0 : i32
    %c0_i32_34 = arith.constant 0 : i32
    %65 = tpu.memref_slice %arg3[%c0_i32_33, %c0_i32_34] : memref<64x32xf32, #tpu.memory_space<any>> -> memref<1x32xf32, #tpu.memory_space<any>>
    %c0_i32_35 = arith.constant 0 : i32
    %c0_i32_36 = arith.constant 0 : i32
    %66 = tpu.memref_slice %arg6[%c0_i32_35, %c0_i32_36] : memref<8x32xf32, #tpu.memory_space<vmem>> -> memref<1x32xf32, #tpu.memory_space<vmem>>
    %67 = tpu.memref_slice %arg7[%c0_i32_32] : memref<8x!tpu.dma_semaphore, #tpu.memory_space<semaphore_mem>> -> memref<1x!tpu.dma_semaphore, #tpu.memory_space<semaphore_mem>>
    %68 = tpu.memref_squeeze %67 : memref<1x!tpu.dma_semaphore, #tpu.memory_space<semaphore_mem>> -> memref<!tpu.dma_semaphore, #tpu.memory_space<semaphore_mem>>
    tpu.wait_dma2 semaphore(%68 : memref<!tpu.dma_semaphore, #tpu.memory_space<semaphore_mem>>) src(%65 : memref<1x32xf32, #tpu.memory_space<any>>) dst(%66 : memref<1x32xf32, #tpu.memory_space<vmem>>)
    %c1_i32_37 = arith.constant 1 : i32
    %c0_i32_38 = arith.constant 0 : i32
    %c0_i32_39 = arith.constant 0 : i32
    %69 = tpu.memref_slice %arg3[%c0_i32_38, %c0_i32_39] : memref<64x32xf32, #tpu.memory_space<any>> -> memref<1x32xf32, #tpu.memory_space<any>>
    %c1_i32_40 = arith.constant 1 : i32
    %c0_i32_41 = arith.constant 0 : i32
    %70 = tpu.memref_slice %arg6[%c1_i32_40, %c0_i32_41] : memref<8x32xf32, #tpu.memory_space<vmem>> -> memref<1x32xf32, #tpu.memory_space<vmem>>
    %71 = tpu.memref_slice %arg7[%c1_i32_37] : memref<8x!tpu.dma_semaphore, #tpu.memory_space<semaphore_mem>> -> memref<1x!tpu.dma_semaphore, #tpu.memory_space<semaphore_mem>>
    %72 = tpu.memref_squeeze %71 : memref<1x!tpu.dma_semaphore, #tpu.memory_space<semaphore_mem>> -> memref<!tpu.dma_semaphore, #tpu.memory_space<semaphore_mem>>
    tpu.wait_dma2 semaphore(%72 : memref<!tpu.dma_semaphore, #tpu.memory_space<semaphore_mem>>) src(%69 : memref<1x32xf32, #tpu.memory_space<any>>) dst(%70 : memref<1x32xf32, #tpu.memory_space<vmem>>)
    %c2_i32_42 = arith.constant 2 : i32
    %c0_i32_43 = arith.constant 0 : i32
    %c0_i32_44 = arith.constant 0 : i32
    %73 = tpu.memref_slice %arg3[%c0_i32_43, %c0_i32_44] : memref<64x32xf32, #tpu.memory_space<any>> -> memref<1x32xf32, #tpu.memory_space<any>>
    %c2_i32_45 = arith.constant 2 : i32
    %c0_i32_46 = arith.constant 0 : i32
    %74 = tpu.memref_slice %arg6[%c2_i32_45, %c0_i32_46] : memref<8x32xf32, #tpu.memory_space<vmem>> -> memref<1x32xf32, #tpu.memory_space<vmem>>
    %75 = tpu.memref_slice %arg7[%c2_i32_42] : memref<8x!tpu.dma_semaphore, #tpu.memory_space<semaphore_mem>> -> memref<1x!tpu.dma_semaphore, #tpu.memory_space<semaphore_mem>>
    %76 = tpu.memref_squeeze %75 : memref<1x!tpu.dma_semaphore, #tpu.memory_space<semaphore_mem>> -> memref<!tpu.dma_semaphore, #tpu.memory_space<semaphore_mem>>
    tpu.wait_dma2 semaphore(%76 : memref<!tpu.dma_semaphore, #tpu.memory_space<semaphore_mem>>) src(%73 : memref<1x32xf32, #tpu.memory_space<any>>) dst(%74 : memref<1x32xf32, #tpu.memory_space<vmem>>)
    %c3_i32_47 = arith.constant 3 : i32
    %c0_i32_48 = arith.constant 0 : i32
    %c0_i32_49 = arith.constant 0 : i32
    %77 = tpu.memref_slice %arg3[%c0_i32_48, %c0_i32_49] : memref<64x32xf32, #tpu.memory_space<any>> -> memref<1x32xf32, #tpu.memory_space<any>>
    %c3_i32_50 = arith.constant 3 : i32
    %c0_i32_51 = arith.constant 0 : i32
    %78 = tpu.memref_slice %arg6[%c3_i32_50, %c0_i32_51] : memref<8x32xf32, #tpu.memory_space<vmem>> -> memref<1x32xf32, #tpu.memory_space<vmem>>
    %79 = tpu.memref_slice %arg7[%c3_i32_47] : memref<8x!tpu.dma_semaphore, #tpu.memory_space<semaphore_mem>> -> memref<1x!tpu.dma_semaphore, #tpu.memory_space<semaphore_mem>>
    %80 = tpu.memref_squeeze %79 : memref<1x!tpu.dma_semaphore, #tpu.memory_space<semaphore_mem>> -> memref<!tpu.dma_semaphore, #tpu.memory_space<semaphore_mem>>
    tpu.wait_dma2 semaphore(%80 : memref<!tpu.dma_semaphore, #tpu.memory_space<semaphore_mem>>) src(%77 : memref<1x32xf32, #tpu.memory_space<any>>) dst(%78 : memref<1x32xf32, #tpu.memory_space<vmem>>)
    %c4_i32_52 = arith.constant 4 : i32
    %c0_i32_53 = arith.constant 0 : i32
    %c0_i32_54 = arith.constant 0 : i32
    %81 = tpu.memref_slice %arg3[%c0_i32_53, %c0_i32_54] : memref<64x32xf32, #tpu.memory_space<any>> -> memref<1x32xf32, #tpu.memory_space<any>>
    %c4_i32_55 = arith.constant 4 : i32
    %c0_i32_56 = arith.constant 0 : i32
    %82 = tpu.memref_slice %arg6[%c4_i32_55, %c0_i32_56] : memref<8x32xf32, #tpu.memory_space<vmem>> -> memref<1x32xf32, #tpu.memory_space<vmem>>
    %83 = tpu.memref_slice %arg7[%c4_i32_52] : memref<8x!tpu.dma_semaphore, #tpu.memory_space<semaphore_mem>> -> memref<1x!tpu.dma_semaphore, #tpu.memory_space<semaphore_mem>>
    %84 = tpu.memref_squeeze %83 : memref<1x!tpu.dma_semaphore, #tpu.memory_space<semaphore_mem>> -> memref<!tpu.dma_semaphore, #tpu.memory_space<semaphore_mem>>
    tpu.wait_dma2 semaphore(%84 : memref<!tpu.dma_semaphore, #tpu.memory_space<semaphore_mem>>) src(%81 : memref<1x32xf32, #tpu.memory_space<any>>) dst(%82 : memref<1x32xf32, #tpu.memory_space<vmem>>)
    %c5_i32_57 = arith.constant 5 : i32
    %c0_i32_58 = arith.constant 0 : i32
    %c0_i32_59 = arith.constant 0 : i32
    %85 = tpu.memref_slice %arg3[%c0_i32_58, %c0_i32_59] : memref<64x32xf32, #tpu.memory_space<any>> -> memref<1x32xf32, #tpu.memory_space<any>>
    %c5_i32_60 = arith.constant 5 : i32
    %c0_i32_61 = arith.constant 0 : i32
    %86 = tpu.memref_slice %arg6[%c5_i32_60, %c0_i32_61] : memref<8x32xf32, #tpu.memory_space<vmem>> -> memref<1x32xf32, #tpu.memory_space<vmem>>
    %87 = tpu.memref_slice %arg7[%c5_i32_57] : memref<8x!tpu.dma_semaphore, #tpu.memory_space<semaphore_mem>> -> memref<1x!tpu.dma_semaphore, #tpu.memory_space<semaphore_mem>>
    %88 = tpu.memref_squeeze %87 : memref<1x!tpu.dma_semaphore, #tpu.memory_space<semaphore_mem>> -> memref<!tpu.dma_semaphore, #tpu.memory_space<semaphore_mem>>
    tpu.wait_dma2 semaphore(%88 : memref<!tpu.dma_semaphore, #tpu.memory_space<semaphore_mem>>) src(%85 : memref<1x32xf32, #tpu.memory_space<any>>) dst(%86 : memref<1x32xf32, #tpu.memory_space<vmem>>)
    %c6_i32_62 = arith.constant 6 : i32
    %c0_i32_63 = arith.constant 0 : i32
    %c0_i32_64 = arith.constant 0 : i32
    %89 = tpu.memref_slice %arg3[%c0_i32_63, %c0_i32_64] : memref<64x32xf32, #tpu.memory_space<any>> -> memref<1x32xf32, #tpu.memory_space<any>>
    %c6_i32_65 = arith.constant 6 : i32
    %c0_i32_66 = arith.constant 0 : i32
    %90 = tpu.memref_slice %arg6[%c6_i32_65, %c0_i32_66] : memref<8x32xf32, #tpu.memory_space<vmem>> -> memref<1x32xf32, #tpu.memory_space<vmem>>
    %91 = tpu.memref_slice %arg7[%c6_i32_62] : memref<8x!tpu.dma_semaphore, #tpu.memory_space<semaphore_mem>> -> memref<1x!tpu.dma_semaphore, #tpu.memory_space<semaphore_mem>>
    %92 = tpu.memref_squeeze %91 : memref<1x!tpu.dma_semaphore, #tpu.memory_space<semaphore_mem>> -> memref<!tpu.dma_semaphore, #tpu.memory_space<semaphore_mem>>
    tpu.wait_dma2 semaphore(%92 : memref<!tpu.dma_semaphore, #tpu.memory_space<semaphore_mem>>) src(%89 : memref<1x32xf32, #tpu.memory_space<any>>) dst(%90 : memref<1x32xf32, #tpu.memory_space<vmem>>)
    %c7_i32_67 = arith.constant 7 : i32
    %c0_i32_68 = arith.constant 0 : i32
    %c0_i32_69 = arith.constant 0 : i32
    %93 = tpu.memref_slice %arg3[%c0_i32_68, %c0_i32_69] : memref<64x32xf32, #tpu.memory_space<any>> -> memref<1x32xf32, #tpu.memory_space<any>>
    %c7_i32_70 = arith.constant 7 : i32
    %c0_i32_71 = arith.constant 0 : i32
    %94 = tpu.memref_slice %arg6[%c7_i32_70, %c0_i32_71] : memref<8x32xf32, #tpu.memory_space<vmem>> -> memref<1x32xf32, #tpu.memory_space<vmem>>
    %95 = tpu.memref_slice %arg7[%c7_i32_67] : memref<8x!tpu.dma_semaphore, #tpu.memory_space<semaphore_mem>> -> memref<1x!tpu.dma_semaphore, #tpu.memory_space<semaphore_mem>>
    %96 = tpu.memref_squeeze %95 : memref<1x!tpu.dma_semaphore, #tpu.memory_space<semaphore_mem>> -> memref<!tpu.dma_semaphore, #tpu.memory_space<semaphore_mem>>
    tpu.wait_dma2 semaphore(%96 : memref<!tpu.dma_semaphore, #tpu.memory_space<semaphore_mem>>) src(%93 : memref<1x32xf32, #tpu.memory_space<any>>) dst(%94 : memref<1x32xf32, #tpu.memory_space<vmem>>)
    %c0 = arith.constant 0 : index
    %c0_72 = arith.constant 0 : index
    %97 = vector.load %arg6[%c0, %c0_72] : memref<8x32xf32, #tpu.memory_space<vmem>>, vector<8x32xf32>
    %c0_73 = arith.constant 0 : index
    %c0_74 = arith.constant 0 : index
    %98 = vector.load %arg4[%c0_73, %c0_74] : memref<8x32xf32, #tpu.memory_space<vmem>>, vector<8x32xf32>
    %99 = arith.addf %97, %98 : vector<8x32xf32>
    %100 = vector.shape_cast %99 : vector<8x32xf32> to vector<1x8x32xf32>
    %c0_75 = arith.constant 0 : index
    %c0_76 = arith.constant 0 : index
    %c0_77 = arith.constant 0 : index
    %101 = vector.load %arg5[%c0_75, %c0_76, %c0_77] : memref<1x8x32xf32, #tpu.memory_space<vmem>>, vector<1x8x32xf32>
    tpu.vector_store %arg5[%c0_75, %c0_76, %c0_77], %100 {strides = array<i32>} : memref<1x8x32xf32, #tpu.memory_space<vmem>>, vector<1x8x32xf32>,
    return
  }
  func.func @transform_1(%arg0: i32, %arg1: i32, %arg2: memref<2x8xi32, #tpu.memory_space<smem>>) -> (i32, i32) {
    %c0_i32 = arith.constant 0 : i32
    %c0_i32_0 = arith.constant 0 : i32
    return %arg1, %c0_i32 : i32, i32
  }
  func.func @transform_2(%arg0: i32, %arg1: i32, %arg2: memref<2x8xi32, #tpu.memory_space<smem>>) -> (i32, i32, i32) {
    %c0_i32 = arith.constant 0 : i32
    %c0_i32_0 = arith.constant 0 : i32
    return %arg0, %arg1, %c0_i32 : i32, i32, i32
  }
}

</mosaic_0001>

<llo_original>
// kernel: tpu_custom_call.1
$region0: #{tpu_custom_call.1}
  #allocation0 [shape = 'u32[]', space=smem, size = 0x4, offset = 0x4, fixed_abs, tag = 'smem constant byte address 0x4 - core index']
  #allocation1 [shape = 'u32[144,128]{1,0:T(1,128)}', space=vmem, size = 0x12000, scoped, tag = 'internal scratch']
  #allocation2 [shape = 'f32[8,32]{1,0:T(8,128)}', space=vmem, size = 0x1000, scoped, tag = 'scratch operand']
  #allocation3 [shape = 's32[8]{0}', space=sflag, size = 0x20, scoped, tag = 'scratch operand']
  #allocation4 [shape = 's32[1]{0}', space=sflag, size = 0x4, scoped, tag = 'scoped memory for tpu_custom_call.1']
  #allocation5 [shape = 'u8[1024]{0}', space=smem, size = 0x400, scoped, tag = 'prefetched SMEM operand 0']
  #allocation8 [shape = 's32[]', space=sflag, size = 0x4, offset = 0, fixed_abs, tag = 'sflag constant byte address 0x0 - dummy sync flag']
  #allocation9 [shape = 's32[]', space=sflag, size = 0x4, offset = 0, fixed_abs, tag = 'sflag constant byte address 0x0 - dummy sync flag']
  #allocation10 [shape = 's32[]', space=sflag, size = 0x4, offset = 0, fixed_abs, tag = 'sflag constant byte address 0x0 - dummy sync flag']
  #allocation11 [shape = 's32[]', space=sflag, size = 0x4, offset = 0, fixed_abs, tag = 'sflag constant byte address 0x0 - dummy sync flag']
  #allocation12 [shape = 's32[]', space=sflag, size = 0x4, offset = 0, fixed_abs, tag = 'sflag constant byte address 0x0 - dummy sync flag']
  #allocation13 [shape = 's32[]', space=sflag, size = 0x4, offset = 0, fixed_abs, tag = 'sflag constant byte address 0x0 - dummy sync flag']
  #allocation14 [shape = 's32[]', space=sflag, size = 0x4, offset = 0, fixed_abs, tag = 'sflag constant byte address 0x0 - dummy sync flag']
  #allocation15 [shape = 's32[]', space=sflag, size = 0x4, offset = 0, fixed_abs, tag = 'sflag constant byte address 0x0 - dummy sync flag']
  %s0 = inlined_call_operand.vmem [shape: s32[2,8], index: 0, kind: input, shape index: {}]
  %s1 = inlined_call_operand.vmem [shape: f32[64,32], index: 1, kind: input, shape index: {}]
  %s2 = inlined_call_operand.vmem [shape: f32[8,32], index: 2, kind: input, shape index: {}]
  %s3 = inlined_call_operand.hbm [shape: f32[2,8,32], index: 3, kind: output, shape index: {}]
  %s4 = sld [smem:[#allocation0]]
  $region277: #{tpu_custom_call.1} parent=0
    _
  %s6 = ssub.s32 1, %s4
  %s7 = scalar_select 0, %s6, %s4
  %s8 = sshll.u32 %s0, 4
  %s9 = int_to_ptr.vmem [resolvable:$true] %s8
  %11 = dma.vmem_to_smem %s9, 32, [#allocation5], [#allocation4]
  %12 = dma.done [#allocation4], 32
  %13 = sfence
  $region1: #{tpu_custom_call.1} parent=0
    #allocation6 [shape = 'u8[8192]{0}', space=vmem, size = 0x2000, scoped, tag = 'output window, operand 0']
    #allocation7 [shape = 's32[2]{0}', space=sflag, size = 0x8, scoped, tag = 'scoped memory for tpu_custom_call.1']
    %14 = vsyncpa [#allocation7], 0
    %s15 = scalar_lea.sflag [#allocation7], 1
    %16 = vsyncpa %s15, 0
    loop: start=0, step=1, limit=4
    $region2: #{tpu_custom_call.1} parent=1 // loop_pre_header
      _
    $region3: #{tpu_custom_call.1} parent=1 // loop_header
      %s18 = sphi 0, %s22
      %p19 = scmp.ge.s32.totalorder %s18, 4
      %s25 = sphi 0, %s37
      %s26 = sphi 0, %s33
      %s27 = sphi 0, %s25
      %s28 = sphi 0, %s26
      %s29 = sphi 0, %s27
      %s30 = sphi 0, %s28
      %s40 = sphi 0, %s42
      %s43 = sphi 0, %s40
      %s44 = sphi 0, %s43
      %s60 = sphi 0, %s44
      %s68 = sphi 0, %s70
      %s71 = sphi 0, %s68
      %s72 = sphi 0, %s71
      %s88 = sphi 0, %s72
    $region4: #{tpu_custom_call.1} parent=1 // loop_header_branch
      %21 = sbr.rel (%p19) target = $region8
    $region5: #{tpu_custom_call.1} parent=1 // loop_body
      %s23 = ssub.s32 %s18, 1
      %s24 = ssub.s32 %s18, 2
      %s31 = sadd.s32 1, %s26
      %p32 = scmp.ge.s32.totalorder %s31, 1
      %s33 = scalar_select %p32, 0, %s31
      %s34 = sadd.s32 1, %s25
      %s35 = scalar_select %p32, %s34, %s25
      %p36 = scmp.ge.s32.totalorder %s35, 2
      %s37 = scalar_select %p36, 0, %s35
      %s38 = ssub.s32 %s26, %s33
      %p39 = scmp.eq.s32.totalorder %s38, 0
      %s41 = sadd.s32 %s40, 1
      %s42 = scalar_select %p39, %s40, %s41
      %p45 = pneg %p39
      %p46 = scmp.eq.s32.totalorder %s18, 1
      %p47 = por %p45, %p46
      %p48 = scmp.ne.s32.totalorder %s40, %s43
      %p49 = scmp.eq.s32.totalorder %s18, 0
      %p50 = por %p48, %p49
      %p51 = scmp.ne.s32.totalorder %s40, %s43
      %p52 = scmp.eq.s32.totalorder %s23, 1
      %p53 = por %p51, %p52
      %p54 = scmp.ne.s32.totalorder %s43, %s44
      %p55 = scmp.eq.s32.totalorder %s23, 0
      %p56 = por %p54, %p55
      %p57 = scmp.ne.s32.totalorder %s43, %s44
      %p58 = scmp.eq.s32.totalorder %s24, 1
      %p59 = por %p57, %p58
      %p61 = scmp.ne.s32.totalorder %s44, %s60
      %p62 = scmp.eq.s32.totalorder %s24, 0
      %p63 = por %p61, %p62
      %s64 = ssub.s32 %s25, %s37
      %s65 = ssub.s32 %s26, %s33
      %s66 = sor.u32 %s64, %s65
      %p67 = scmp.eq.s32.totalorder %s66, 0
      %s69 = sadd.s32 %s68, 1
      %s70 = scalar_select %p67, %s68, %s69
      %p73 = pneg %p67
      %p74 = scmp.eq.s32.totalorder %s18, 1
      %p75 = por %p73, %p74
      %p76 = scmp.ne.s32.totalorder %s68, %s71
      %p77 = scmp.eq.s32.totalorder %s18, 0
      %p78 = por %p76, %p77
      %p79 = scmp.ne.s32.totalorder %s68, %s71
      %p80 = scmp.eq.s32.totalorder %s23, 1
      %p81 = por %p79, %p80
      %p82 = scmp.ne.s32.totalorder %s71, %s72
      %p83 = scmp.eq.s32.totalorder %s23, 0
      %p84 = por %p82, %p83
      %p85 = scmp.ne.s32.totalorder %s71, %s72
      %p86 = scmp.eq.s32.totalorder %s24, 1
      %p87 = por %p85, %p86
      %p89 = scmp.ne.s32.totalorder %s72, %s88
      %p90 = scmp.eq.s32.totalorder %s24, 0
      %p91 = por %p89, %p90
      %p92 = scmp.le.s32.totalorder 1, %s18
      %p93 = scmp.lt.s32.totalorder %s18, 3
      %p94 = pnand %p92, %p93
      %p95 = pneg %p94
      // Predicated region
      $region9: #{tpu_custom_call.1} parent=5 // pred_check
        _
      $region10: #{tpu_custom_call.1} parent=5 // pred_check_branch
        %97 = sbr.rel (%p94) target = $region12
      $region11: #{tpu_custom_call.1} parent=5 // pred_region
        %s98 = ssub.s32 %s18, 1
        // Predicated region
        $region13: #{tpu_custom_call.1} parent=11 // pred_check
          %p99 = pneg %p56
        $region14: #{tpu_custom_call.1} parent=11 // pred_check_branch
          %101 = sbr.rel (%p99) target = $region16
        $region15: #{tpu_custom_call.1} parent=11 // pred_region
          %p102 = scmp.lt.s32.totalorder %s28, 0
          %s103 = scalar_select %p102, %s28, 0
          %s104 = smul.addr %s103, 8
          %s105 = scalar_lea.vmem %s2, %s104
        $region16: #{tpu_custom_call.1} parent=11 // pred_fallthru
          _
      $region12: #{tpu_custom_call.1} parent=5 // pred_fallthru
        _
      %p106 = scmp.lt.s32.totalorder %s18, 2
      // Predicated region
      $region17: #{tpu_custom_call.1} parent=5 // pred_check
        %p107 = pneg %p106
      $region18: #{tpu_custom_call.1} parent=5 // pred_check_branch
        %109 = sbr.rel (%p107) target = $region20
      $region19: #{tpu_custom_call.1} parent=5 // pred_region
        _
      $region20: #{tpu_custom_call.1} parent=5 // pred_fallthru
        _
      %p110 = scmp.le.s32.totalorder 1, %s18
      %p111 = scmp.lt.s32.totalorder %s18, 3
      %p112 = pnand %p110, %p111
      %p113 = pneg %p112
      // Predicated region
      $region21: #{tpu_custom_call.1} parent=5 // pred_check
        _
      $region22: #{tpu_custom_call.1} parent=5 // pred_check_branch
        %115 = sbr.rel (%p112) target = $region24
      $region23: #{tpu_custom_call.1} parent=5 // pred_region
        %s116 = ssub.s32 %s18, 1
        %p117 = scmp.lt.s32.totalorder %s28, 0
        %s118 = scalar_select %p117, %s28, 0
        %s119 = smul.addr %s118, 8
        %s120 = scalar_lea.vmem %s2, %s119
        %p121 = pneg %p56
        %p122 = pneg %p53
        %p123 = pneg %p84
        %p124 = pneg %p81
        %s125 = sand.u32 %s71, 1
        %s126 = scalar_lea.sflag [#allocation7], %s125
        %s127 = sand.u32 %s71, 1
        %s128 = smul.addr %s127, 8
        %s129 = scalar_lea.vmem [#allocation6], %s128
        %p130 = scmp.lt.s32.totalorder %s28, 0
        %s131 = scalar_select %p130, %s28, 0
        %s132 = smul.addr %s131, 8
        %s133 = scalar_lea.vmem %s2, %s132
        %s134 = smul.u32 %s28, 8
        %s135 = sshra.s32 %s134, 7
        %s136 = sand.u32 %s134, 127
        %s137 = sadd.s32 %s135, %s27
        %s138 = smul.u32 %s137, 128
        %s139 = sshra.s32 %s134, 7
        %s140 = sand.u32 %s134, 127
        %s141 = sadd.s32 %s138, %s140
        %s142 = sld [smem:[#allocation5 + %s141]]
        %s143 = scalar_lea.vmem %s1, %s142
        %p145 = scmp.lt.u32.totalorder 1, 8
        %p146 = pneg %p145
        // Predicated region
        $region25: #{tpu_custom_call.1} parent=23 // pred_check
          _
        $region26: #{tpu_custom_call.1} parent=23 // pred_check_branch
          %148 = sbr.rel (%p145) target = $region28
        $region27: #{tpu_custom_call.1} parent=23 // pred_region
          %s164 = sand.u32 1, 7
          %p165 = scmp.eq.s32.totalorder %s164, 0
          %p166 = pneg %p165
          // Predicated region
          $region40: #{tpu_custom_call.1} parent=27 // pred_check
            _
          $region41: #{tpu_custom_call.1} parent=27 // pred_check_branch
            %168 = sbr.rel (%p165) target = $region43
          $region42: #{tpu_custom_call.1} parent=27 // pred_region
            %s169 = sand.u32 1, 7
            %s170 = ssub.s32 1, %s169
            %s171 = scalar_lea.vmem %s143, %s170
            %s172 = ssub.s32 1, %s169
            %s173 = scalar_lea.vmem [#allocation2], %s172
            %s174 = sshll.u32 1, %s169
            %s175 = ssub.s32 %s174, 1
            loop: start=0, step=1, limit=1
            $region44: #{tpu_custom_call.1} parent=42 // loop_pre_header
              _
            $region45: #{tpu_custom_call.1} parent=42 // loop_header
              %s177 = sphi 0, %s181
              %p178 = scmp.ge.s32.totalorder %s177, 1
              %s182 = sphi %s171, %s171
              %s183 = sphi %s173, %s173
            $region46: #{tpu_custom_call.1} parent=42 // loop_header_branch
              %180 = sbr.rel (%p178) target = $region50
            $region47: #{tpu_custom_call.1} parent=42 // loop_body
              %v184 = vld [vmem:[%s182] sm:%s175]
              %185 = vst [vmem:[%s183] sm:%s175] %v184
            $region48: #{tpu_custom_call.1} parent=42 // loop_footer
              %s181 = sadd.s32 1, %s177
            $region49: #{tpu_custom_call.1} parent=42 // loop_footer_branch
              %176 = sbr.rel target = $region45
            $region50: #{tpu_custom_call.1} parent=42 // loop_exit
              _
          $region43: #{tpu_custom_call.1} parent=27 // pred_fallthru
            _
        $region28: #{tpu_custom_call.1} parent=23 // pred_fallthru
          _
        // Predicated region
        $region29: #{tpu_custom_call.1} parent=23 // pred_check
          %p149 = pneg %p145
        $region30: #{tpu_custom_call.1} parent=23 // pred_check_branch
          %151 = sbr.rel (%p149) target = $region32
        $region31: #{tpu_custom_call.1} parent=23 // pred_region
          %s152 = sshll.u32 1, 1
          %s153 = ssub.s32 %s152, 1
          loop: start=0, step=1, limit=1
          $region33: #{tpu_custom_call.1} parent=31 // loop_pre_header
            _
          $region34: #{tpu_custom_call.1} parent=31 // loop_header
            %s155 = sphi 0, %s159
            %p156 = scmp.ge.s32.totalorder %s155, 1
            %s160 = sphi %s143, %s143
            %s161 = sphi [#allocation2], [#allocation2]
          $region35: #{tpu_custom_call.1} parent=31 // loop_header_branch
            %158 = sbr.rel (%p156) target = $region39
          $region36: #{tpu_custom_call.1} parent=31 // loop_body
            %v162 = vld [vmem:[%s160] sm:%s153]
            %163 = vst [vmem:[%s161] sm:%s153] %v162
          $region37: #{tpu_custom_call.1} parent=31 // loop_footer
            %s159 = sadd.s32 1, %s155
          $region38: #{tpu_custom_call.1} parent=31 // loop_footer_branch
            %154 = sbr.rel target = $region34
          $region39: #{tpu_custom_call.1} parent=31 // loop_exit
            _
        $region32: #{tpu_custom_call.1} parent=23 // pred_fallthru
          _
        // Predicated region
        $region51: #{tpu_custom_call.1} parent=23 // pred_check
          _
        $region52: #{tpu_custom_call.1} parent=23 // pred_check_branch
          %188 = sbr.rel (0) target = $region54
        $region53: #{tpu_custom_call.1} parent=23 // pred_region
          %189 = vsyncadd [#allocation3], 16
        $region54: #{tpu_custom_call.1} parent=23 // pred_fallthru
          _
        %s190 = sadd.s32 %s134, 1
        %s191 = sshra.s32 %s190, 7
        %s192 = sand.u32 %s190, 127
        %s193 = sadd.s32 %s191, %s27
        %s194 = smul.u32 %s193, 128
        %s195 = sshra.s32 %s190, 7
        %s196 = sand.u32 %s190, 127
        %s197 = sadd.s32 %s194, %s196
        %s198 = sld [smem:[#allocation5 + %s197]]
        %s199 = scalar_lea.vmem %s1, %s198
        %s200 = scalar_lea.vmem [#allocation2], 1
        %s201 = scalar_lea.sflag [#allocation3], 1
        %p203 = scmp.lt.u32.totalorder 1, 8
        %p204 = pneg %p203
        // Predicated region
        $region55: #{tpu_custom_call.1} parent=23 // pred_check
          _
        $region56: #{tpu_custom_call.1} parent=23 // pred_check_branch
          %206 = sbr.rel (%p203) target = $region58
        $region57: #{tpu_custom_call.1} parent=23 // pred_region
          %s222 = sand.u32 1, 7
          %p223 = scmp.eq.s32.totalorder %s222, 0
          %p224 = pneg %p223
          // Predicated region
          $region70: #{tpu_custom_call.1} parent=57 // pred_check
            _
          $region71: #{tpu_custom_call.1} parent=57 // pred_check_branch
            %226 = sbr.rel (%p223) target = $region73
          $region72: #{tpu_custom_call.1} parent=57 // pred_region
            %s227 = sand.u32 1, 7
            %s228 = ssub.s32 1, %s227
            %s229 = scalar_lea.vmem %s199, %s228
            %s230 = ssub.s32 1, %s227
            %s231 = scalar_lea.vmem %s200, %s230 [#allocation2]
            %s232 = sshll.u32 1, %s227
            %s233 = ssub.s32 %s232, 1
            loop: start=0, step=1, limit=1
            $region74: #{tpu_custom_call.1} parent=72 // loop_pre_header
              _
            $region75: #{tpu_custom_call.1} parent=72 // loop_header
              %s235 = sphi 0, %s239
              %p236 = scmp.ge.s32.totalorder %s235, 1
              %s240 = sphi %s229, %s229
              %s241 = sphi %s231, %s231
            $region76: #{tpu_custom_call.1} parent=72 // loop_header_branch
              %238 = sbr.rel (%p236) target = $region80
            $region77: #{tpu_custom_call.1} parent=72 // loop_body
              %v242 = vld [vmem:[%s240] sm:%s233]
              %243 = vst [vmem:[%s241] sm:%s233] %v242
            $region78: #{tpu_custom_call.1} parent=72 // loop_footer
              %s239 = sadd.s32 1, %s235
            $region79: #{tpu_custom_call.1} parent=72 // loop_footer_branch
              %234 = sbr.rel target = $region75
            $region80: #{tpu_custom_call.1} parent=72 // loop_exit
              _
          $region73: #{tpu_custom_call.1} parent=57 // pred_fallthru
            _
        $region58: #{tpu_custom_call.1} parent=23 // pred_fallthru
          _
        // Predicated region
        $region59: #{tpu_custom_call.1} parent=23 // pred_check
          %p207 = pneg %p203
        $region60: #{tpu_custom_call.1} parent=23 // pred_check_branch
          %209 = sbr.rel (%p207) target = $region62
        $region61: #{tpu_custom_call.1} parent=23 // pred_region
          %s210 = sshll.u32 1, 1
          %s211 = ssub.s32 %s210, 1
          loop: start=0, step=1, limit=1
          $region63: #{tpu_custom_call.1} parent=61 // loop_pre_header
            _
          $region64: #{tpu_custom_call.1} parent=61 // loop_header
            %s213 = sphi 0, %s217
            %p214 = scmp.ge.s32.totalorder %s213, 1
            %s218 = sphi %s199, %s199
            %s219 = sphi %s200, %s200
          $region65: #{tpu_custom_call.1} parent=61 // loop_header_branch
            %216 = sbr.rel (%p214) target = $region69
          $region66: #{tpu_custom_call.1} parent=61 // loop_body
            %v220 = vld [vmem:[%s218] sm:%s211]
            %221 = vst [vmem:[%s219] sm:%s211] %v220
          $region67: #{tpu_custom_call.1} parent=61 // loop_footer
            %s217 = sadd.s32 1, %s213
          $region68: #{tpu_custom_call.1} parent=61 // loop_footer_branch
            %212 = sbr.rel target = $region64
          $region69: #{tpu_custom_call.1} parent=61 // loop_exit
            _
        $region62: #{tpu_custom_call.1} parent=23 // pred_fallthru
          _
        // Predicated region
        $region81: #{tpu_custom_call.1} parent=23 // pred_check
          _
        $region82: #{tpu_custom_call.1} parent=23 // pred_check_branch
          %246 = sbr.rel (0) target = $region84
        $region83: #{tpu_custom_call.1} parent=23 // pred_region
          %247 = vsyncadd %s201, 16
        $region84: #{tpu_custom_call.1} parent=23 // pred_fallthru
          _
        %s248 = sadd.s32 %s134, 2
        %s249 = sshra.s32 %s248, 7
        %s250 = sand.u32 %s248, 127
        %s251 = sadd.s32 %s249, %s27
        %s252 = smul.u32 %s251, 128
        %s253 = sshra.s32 %s248, 7
        %s254 = sand.u32 %s248, 127
        %s255 = sadd.s32 %s252, %s254
        %s256 = sld [smem:[#allocation5 + %s255]]
        %s257 = scalar_lea.vmem %s1, %s256
        %s258 = scalar_lea.vmem [#allocation2], 2
        %s259 = scalar_lea.sflag [#allocation3], 2
        %p261 = scmp.lt.u32.totalorder 1, 8
        %p262 = pneg %p261
        // Predicated region
        $region85: #{tpu_custom_call.1} parent=23 // pred_check
          _
        $region86: #{tpu_custom_call.1} parent=23 // pred_check_branch
          %264 = sbr.rel (%p261) target = $region88
        $region87: #{tpu_custom_call.1} parent=23 // pred_region
          %s280 = sand.u32 1, 7
          %p281 = scmp.eq.s32.totalorder %s280, 0
          %p282 = pneg %p281
          // Predicated region
          $region100: #{tpu_custom_call.1} parent=87 // pred_check
            _
          $region101: #{tpu_custom_call.1} parent=87 // pred_check_branch
            %284 = sbr.rel (%p281) target = $region103
          $region102: #{tpu_custom_call.1} parent=87 // pred_region
            %s285 = sand.u32 1, 7
            %s286 = ssub.s32 1, %s285
            %s287 = scalar_lea.vmem %s257, %s286
            %s288 = ssub.s32 1, %s285
            %s289 = scalar_lea.vmem %s258, %s288 [#allocation2]
            %s290 = sshll.u32 1, %s285
            %s291 = ssub.s32 %s290, 1
            loop: start=0, step=1, limit=1
            $region104: #{tpu_custom_call.1} parent=102 // loop_pre_header
              _
            $region105: #{tpu_custom_call.1} parent=102 // loop_header
              %s293 = sphi 0, %s297
              %p294 = scmp.ge.s32.totalorder %s293, 1
              %s298 = sphi %s287, %s287
              %s299 = sphi %s289, %s289
            $region106: #{tpu_custom_call.1} parent=102 // loop_header_branch
              %296 = sbr.rel (%p294) target = $region110
            $region107: #{tpu_custom_call.1} parent=102 // loop_body
              %v300 = vld [vmem:[%s298] sm:%s291]
              %301 = vst [vmem:[%s299] sm:%s291] %v300
            $region108: #{tpu_custom_call.1} parent=102 // loop_footer
              %s297 = sadd.s32 1, %s293
            $region109: #{tpu_custom_call.1} parent=102 // loop_footer_branch
              %292 = sbr.rel target = $region105
            $region110: #{tpu_custom_call.1} parent=102 // loop_exit
              _
          $region103: #{tpu_custom_call.1} parent=87 // pred_fallthru
            _
        $region88: #{tpu_custom_call.1} parent=23 // pred_fallthru
          _
        // Predicated region
        $region89: #{tpu_custom_call.1} parent=23 // pred_check
          %p265 = pneg %p261
        $region90: #{tpu_custom_call.1} parent=23 // pred_check_branch
          %267 = sbr.rel (%p265) target = $region92
        $region91: #{tpu_custom_call.1} parent=23 // pred_region
          %s268 = sshll.u32 1, 1
          %s269 = ssub.s32 %s268, 1
          loop: start=0, step=1, limit=1
          $region93: #{tpu_custom_call.1} parent=91 // loop_pre_header
            _
          $region94: #{tpu_custom_call.1} parent=91 // loop_header
            %s271 = sphi 0, %s275
            %p272 = scmp.ge.s32.totalorder %s271, 1
            %s276 = sphi %s257, %s257
            %s277 = sphi %s258, %s258
          $region95: #{tpu_custom_call.1} parent=91 // loop_header_branch
            %274 = sbr.rel (%p272) target = $region99
          $region96: #{tpu_custom_call.1} parent=91 // loop_body
            %v278 = vld [vmem:[%s276] sm:%s269]
            %279 = vst [vmem:[%s277] sm:%s269] %v278
          $region97: #{tpu_custom_call.1} parent=91 // loop_footer
            %s275 = sadd.s32 1, %s271
          $region98: #{tpu_custom_call.1} parent=91 // loop_footer_branch
            %270 = sbr.rel target = $region94
          $region99: #{tpu_custom_call.1} parent=91 // loop_exit
            _
        $region92: #{tpu_custom_call.1} parent=23 // pred_fallthru
          _
        // Predicated region
        $region111: #{tpu_custom_call.1} parent=23 // pred_check
          _
        $region112: #{tpu_custom_call.1} parent=23 // pred_check_branch
          %304 = sbr.rel (0) target = $region114
        $region113: #{tpu_custom_call.1} parent=23 // pred_region
          %305 = vsyncadd %s259, 16
        $region114: #{tpu_custom_call.1} parent=23 // pred_fallthru
          _
        %s306 = sadd.s32 %s134, 3
        %s307 = sshra.s32 %s306, 7
        %s308 = sand.u32 %s306, 127
        %s309 = sadd.s32 %s307, %s27
        %s310 = smul.u32 %s309, 128
        %s311 = sshra.s32 %s306, 7
        %s312 = sand.u32 %s306, 127
        %s313 = sadd.s32 %s310, %s312
        %s314 = sld [smem:[#allocation5 + %s313]]
        %s315 = scalar_lea.vmem %s1, %s314
        %s316 = scalar_lea.vmem [#allocation2], 3
        %s317 = scalar_lea.sflag [#allocation3], 3
        %p319 = scmp.lt.u32.totalorder 1, 8
        %p320 = pneg %p319
        // Predicated region
        $region115: #{tpu_custom_call.1} parent=23 // pred_check
          _
        $region116: #{tpu_custom_call.1} parent=23 // pred_check_branch
          %322 = sbr.rel (%p319) target = $region118
        $region117: #{tpu_custom_call.1} parent=23 // pred_region
          %s338 = sand.u32 1, 7
          %p339 = scmp.eq.s32.totalorder %s338, 0
          %p340 = pneg %p339
          // Predicated region
          $region130: #{tpu_custom_call.1} parent=117 // pred_check
            _
          $region131: #{tpu_custom_call.1} parent=117 // pred_check_branch
            %342 = sbr.rel (%p339) target = $region133
          $region132: #{tpu_custom_call.1} parent=117 // pred_region
            %s343 = sand.u32 1, 7
            %s344 = ssub.s32 1, %s343
            %s345 = scalar_lea.vmem %s315, %s344
            %s346 = ssub.s32 1, %s343
            %s347 = scalar_lea.vmem %s316, %s346 [#allocation2]
            %s348 = sshll.u32 1, %s343
            %s349 = ssub.s32 %s348, 1
            loop: start=0, step=1, limit=1
            $region134: #{tpu_custom_call.1} parent=132 // loop_pre_header
              _
            $region135: #{tpu_custom_call.1} parent=132 // loop_header
              %s351 = sphi 0, %s355
              %p352 = scmp.ge.s32.totalorder %s351, 1
              %s356 = sphi %s345, %s345
              %s357 = sphi %s347, %s347
            $region136: #{tpu_custom_call.1} parent=132 // loop_header_branch
              %354 = sbr.rel (%p352) target = $region140
            $region137: #{tpu_custom_call.1} parent=132 // loop_body
              %v358 = vld [vmem:[%s356] sm:%s349]
              %359 = vst [vmem:[%s357] sm:%s349] %v358
            $region138: #{tpu_custom_call.1} parent=132 // loop_footer
              %s355 = sadd.s32 1, %s351
            $region139: #{tpu_custom_call.1} parent=132 // loop_footer_branch
              %350 = sbr.rel target = $region135
            $region140: #{tpu_custom_call.1} parent=132 // loop_exit
              _
          $region133: #{tpu_custom_call.1} parent=117 // pred_fallthru
            _
        $region118: #{tpu_custom_call.1} parent=23 // pred_fallthru
          _
        // Predicated region
        $region119: #{tpu_custom_call.1} parent=23 // pred_check
          %p323 = pneg %p319
        $region120: #{tpu_custom_call.1} parent=23 // pred_check_branch
          %325 = sbr.rel (%p323) target = $region122
        $region121: #{tpu_custom_call.1} parent=23 // pred_region
          %s326 = sshll.u32 1, 1
          %s327 = ssub.s32 %s326, 1
          loop: start=0, step=1, limit=1
          $region123: #{tpu_custom_call.1} parent=121 // loop_pre_header
            _
          $region124: #{tpu_custom_call.1} parent=121 // loop_header
            %s329 = sphi 0, %s333
            %p330 = scmp.ge.s32.totalorder %s329, 1
            %s334 = sphi %s315, %s315
            %s335 = sphi %s316, %s316
          $region125: #{tpu_custom_call.1} parent=121 // loop_header_branch
            %332 = sbr.rel (%p330) target = $region129
          $region126: #{tpu_custom_call.1} parent=121 // loop_body
            %v336 = vld [vmem:[%s334] sm:%s327]
            %337 = vst [vmem:[%s335] sm:%s327] %v336
          $region127: #{tpu_custom_call.1} parent=121 // loop_footer
            %s333 = sadd.s32 1, %s329
          $region128: #{tpu_custom_call.1} parent=121 // loop_footer_branch
            %328 = sbr.rel target = $region124
          $region129: #{tpu_custom_call.1} parent=121 // loop_exit
            _
        $region122: #{tpu_custom_call.1} parent=23 // pred_fallthru
          _
        // Predicated region
        $region141: #{tpu_custom_call.1} parent=23 // pred_check
          _
        $region142: #{tpu_custom_call.1} parent=23 // pred_check_branch
          %362 = sbr.rel (0) target = $region144
        $region143: #{tpu_custom_call.1} parent=23 // pred_region
          %363 = vsyncadd %s317, 16
        $region144: #{tpu_custom_call.1} parent=23 // pred_fallthru
          _
        %s364 = sadd.s32 %s134, 4
        %s365 = sshra.s32 %s364, 7
        %s366 = sand.u32 %s364, 127
        %s367 = sadd.s32 %s365, %s27
        %s368 = smul.u32 %s367, 128
        %s369 = sshra.s32 %s364, 7
        %s370 = sand.u32 %s364, 127
        %s371 = sadd.s32 %s368, %s370
        %s372 = sld [smem:[#allocation5 + %s371]]
        %s373 = scalar_lea.vmem %s1, %s372
        %s374 = scalar_lea.vmem [#allocation2], 4
        %s375 = scalar_lea.sflag [#allocation3], 4
        %p377 = scmp.lt.u32.totalorder 1, 8
        %p378 = pneg %p377
        // Predicated region
        $region145: #{tpu_custom_call.1} parent=23 // pred_check
          _
        $region146: #{tpu_custom_call.1} parent=23 // pred_check_branch
          %380 = sbr.rel (%p377) target = $region148
        $region147: #{tpu_custom_call.1} parent=23 // pred_region
          %s396 = sand.u32 1, 7
          %p397 = scmp.eq.s32.totalorder %s396, 0
          %p398 = pneg %p397
          // Predicated region
          $region160: #{tpu_custom_call.1} parent=147 // pred_check
            _
          $region161: #{tpu_custom_call.1} parent=147 // pred_check_branch
            %400 = sbr.rel (%p397) target = $region163
          $region162: #{tpu_custom_call.1} parent=147 // pred_region
            %s401 = sand.u32 1, 7
            %s402 = ssub.s32 1, %s401
            %s403 = scalar_lea.vmem %s373, %s402
            %s404 = ssub.s32 1, %s401
            %s405 = scalar_lea.vmem %s374, %s404 [#allocation2]
            %s406 = sshll.u32 1, %s401
            %s407 = ssub.s32 %s406, 1
            loop: start=0, step=1, limit=1
            $region164: #{tpu_custom_call.1} parent=162 // loop_pre_header
              _
            $region165: #{tpu_custom_call.1} parent=162 // loop_header
              %s409 = sphi 0, %s413
              %p410 = scmp.ge.s32.totalorder %s409, 1
              %s414 = sphi %s403, %s403
              %s415 = sphi %s405, %s405
            $region166: #{tpu_custom_call.1} parent=162 // loop_header_branch
              %412 = sbr.rel (%p410) target = $region170
            $region167: #{tpu_custom_call.1} parent=162 // loop_body
              %v416 = vld [vmem:[%s414] sm:%s407]
              %417 = vst [vmem:[%s415] sm:%s407] %v416
            $region168: #{tpu_custom_call.1} parent=162 // loop_footer
              %s413 = sadd.s32 1, %s409
            $region169: #{tpu_custom_call.1} parent=162 // loop_footer_branch
              %408 = sbr.rel target = $region165
            $region170: #{tpu_custom_call.1} parent=162 // loop_exit
              _
          $region163: #{tpu_custom_call.1} parent=147 // pred_fallthru
            _
        $region148: #{tpu_custom_call.1} parent=23 // pred_fallthru
          _
        // Predicated region
        $region149: #{tpu_custom_call.1} parent=23 // pred_check
          %p381 = pneg %p377
        $region150: #{tpu_custom_call.1} parent=23 // pred_check_branch
          %383 = sbr.rel (%p381) target = $region152
        $region151: #{tpu_custom_call.1} parent=23 // pred_region
          %s384 = sshll.u32 1, 1
          %s385 = ssub.s32 %s384, 1
          loop: start=0, step=1, limit=1
          $region153: #{tpu_custom_call.1} parent=151 // loop_pre_header
            _
          $region154: #{tpu_custom_call.1} parent=151 // loop_header
            %s387 = sphi 0, %s391
            %p388 = scmp.ge.s32.totalorder %s387, 1
            %s392 = sphi %s373, %s373
            %s393 = sphi %s374, %s374
          $region155: #{tpu_custom_call.1} parent=151 // loop_header_branch
            %390 = sbr.rel (%p388) target = $region159
          $region156: #{tpu_custom_call.1} parent=151 // loop_body
            %v394 = vld [vmem:[%s392] sm:%s385]
            %395 = vst [vmem:[%s393] sm:%s385] %v394
          $region157: #{tpu_custom_call.1} parent=151 // loop_footer
            %s391 = sadd.s32 1, %s387
          $region158: #{tpu_custom_call.1} parent=151 // loop_footer_branch
            %386 = sbr.rel target = $region154
          $region159: #{tpu_custom_call.1} parent=151 // loop_exit
            _
        $region152: #{tpu_custom_call.1} parent=23 // pred_fallthru
          _
        // Predicated region
        $region171: #{tpu_custom_call.1} parent=23 // pred_check
          _
        $region172: #{tpu_custom_call.1} parent=23 // pred_check_branch
          %420 = sbr.rel (0) target = $region174
        $region173: #{tpu_custom_call.1} parent=23 // pred_region
          %421 = vsyncadd %s375, 16
        $region174: #{tpu_custom_call.1} parent=23 // pred_fallthru
          _
        %s422 = sadd.s32 %s134, 5
        %s423 = sshra.s32 %s422, 7
        %s424 = sand.u32 %s422, 127
        %s425 = sadd.s32 %s423, %s27
        %s426 = smul.u32 %s425, 128
        %s427 = sshra.s32 %s422, 7
        %s428 = sand.u32 %s422, 127
        %s429 = sadd.s32 %s426, %s428
        %s430 = sld [smem:[#allocation5 + %s429]]
        %s431 = scalar_lea.vmem %s1, %s430
        %s432 = scalar_lea.vmem [#allocation2], 5
        %s433 = scalar_lea.sflag [#allocation3], 5
        %p435 = scmp.lt.u32.totalorder 1, 8
        %p436 = pneg %p435
        // Predicated region
        $region175: #{tpu_custom_call.1} parent=23 // pred_check
          _
        $region176: #{tpu_custom_call.1} parent=23 // pred_check_branch
          %438 = sbr.rel (%p435) target = $region178
        $region177: #{tpu_custom_call.1} parent=23 // pred_region
          %s454 = sand.u32 1, 7
          %p455 = scmp.eq.s32.totalorder %s454, 0
          %p456 = pneg %p455
          // Predicated region
          $region190: #{tpu_custom_call.1} parent=177 // pred_check
            _
          $region191: #{tpu_custom_call.1} parent=177 // pred_check_branch
            %458 = sbr.rel (%p455) target = $region193
          $region192: #{tpu_custom_call.1} parent=177 // pred_region
            %s459 = sand.u32 1, 7
            %s460 = ssub.s32 1, %s459
            %s461 = scalar_lea.vmem %s431, %s460
            %s462 = ssub.s32 1, %s459
            %s463 = scalar_lea.vmem %s432, %s462 [#allocation2]
            %s464 = sshll.u32 1, %s459
            %s465 = ssub.s32 %s464, 1
            loop: start=0, step=1, limit=1
            $region194: #{tpu_custom_call.1} parent=192 // loop_pre_header
              _
            $region195: #{tpu_custom_call.1} parent=192 // loop_header
              %s467 = sphi 0, %s471
              %p468 = scmp.ge.s32.totalorder %s467, 1
              %s472 = sphi %s461, %s461
              %s473 = sphi %s463, %s463
            $region196: #{tpu_custom_call.1} parent=192 // loop_header_branch
              %470 = sbr.rel (%p468) target = $region200
            $region197: #{tpu_custom_call.1} parent=192 // loop_body
              %v474 = vld [vmem:[%s472] sm:%s465]
              %475 = vst [vmem:[%s473] sm:%s465] %v474
            $region198: #{tpu_custom_call.1} parent=192 // loop_footer
              %s471 = sadd.s32 1, %s467
            $region199: #{tpu_custom_call.1} parent=192 // loop_footer_branch
              %466 = sbr.rel target = $region195
            $region200: #{tpu_custom_call.1} parent=192 // loop_exit
              _
          $region193: #{tpu_custom_call.1} parent=177 // pred_fallthru
            _
        $region178: #{tpu_custom_call.1} parent=23 // pred_fallthru
          _
        // Predicated region
        $region179: #{tpu_custom_call.1} parent=23 // pred_check
          %p439 = pneg %p435
        $region180: #{tpu_custom_call.1} parent=23 // pred_check_branch
          %441 = sbr.rel (%p439) target = $region182
        $region181: #{tpu_custom_call.1} parent=23 // pred_region
          %s442 = sshll.u32 1, 1
          %s443 = ssub.s32 %s442, 1
          loop: start=0, step=1, limit=1
          $region183: #{tpu_custom_call.1} parent=181 // loop_pre_header
            _
          $region184: #{tpu_custom_call.1} parent=181 // loop_header
            %s445 = sphi 0, %s449
            %p446 = scmp.ge.s32.totalorder %s445, 1
            %s450 = sphi %s431, %s431
            %s451 = sphi %s432, %s432
          $region185: #{tpu_custom_call.1} parent=181 // loop_header_branch
            %448 = sbr.rel (%p446) target = $region189
          $region186: #{tpu_custom_call.1} parent=181 // loop_body
            %v452 = vld [vmem:[%s450] sm:%s443]
            %453 = vst [vmem:[%s451] sm:%s443] %v452
          $region187: #{tpu_custom_call.1} parent=181 // loop_footer
            %s449 = sadd.s32 1, %s445
          $region188: #{tpu_custom_call.1} parent=181 // loop_footer_branch
            %444 = sbr.rel target = $region184
          $region189: #{tpu_custom_call.1} parent=181 // loop_exit
            _
        $region182: #{tpu_custom_call.1} parent=23 // pred_fallthru
          _
        // Predicated region
        $region201: #{tpu_custom_call.1} parent=23 // pred_check
          _
        $region202: #{tpu_custom_call.1} parent=23 // pred_check_branch
          %478 = sbr.rel (0) target = $region204
        $region203: #{tpu_custom_call.1} parent=23 // pred_region
          %479 = vsyncadd %s433, 16
        $region204: #{tpu_custom_call.1} parent=23 // pred_fallthru
          _
        %s480 = sadd.s32 %s134, 6
        %s481 = sshra.s32 %s480, 7
        %s482 = sand.u32 %s480, 127
        %s483 = sadd.s32 %s481, %s27
        %s484 = smul.u32 %s483, 128
        %s485 = sshra.s32 %s480, 7
        %s486 = sand.u32 %s480, 127
        %s487 = sadd.s32 %s484, %s486
        %s488 = sld [smem:[#allocation5 + %s487]]
        %s489 = scalar_lea.vmem %s1, %s488
        %s490 = scalar_lea.vmem [#allocation2], 6
        %s491 = scalar_lea.sflag [#allocation3], 6
        %p493 = scmp.lt.u32.totalorder 1, 8
        %p494 = pneg %p493
        // Predicated region
        $region205: #{tpu_custom_call.1} parent=23 // pred_check
          _
        $region206: #{tpu_custom_call.1} parent=23 // pred_check_branch
          %496 = sbr.rel (%p493) target = $region208
        $region207: #{tpu_custom_call.1} parent=23 // pred_region
          %s512 = sand.u32 1, 7
          %p513 = scmp.eq.s32.totalorder %s512, 0
          %p514 = pneg %p513
          // Predicated region
          $region220: #{tpu_custom_call.1} parent=207 // pred_check
            _
          $region221: #{tpu_custom_call.1} parent=207 // pred_check_branch
            %516 = sbr.rel (%p513) target = $region223
          $region222: #{tpu_custom_call.1} parent=207 // pred_region
            %s517 = sand.u32 1, 7
            %s518 = ssub.s32 1, %s517
            %s519 = scalar_lea.vmem %s489, %s518
            %s520 = ssub.s32 1, %s517
            %s521 = scalar_lea.vmem %s490, %s520 [#allocation2]
            %s522 = sshll.u32 1, %s517
            %s523 = ssub.s32 %s522, 1
            loop: start=0, step=1, limit=1
            $region224: #{tpu_custom_call.1} parent=222 // loop_pre_header
              _
            $region225: #{tpu_custom_call.1} parent=222 // loop_header
              %s525 = sphi 0, %s529
              %p526 = scmp.ge.s32.totalorder %s525, 1
              %s530 = sphi %s519, %s519
              %s531 = sphi %s521, %s521
            $region226: #{tpu_custom_call.1} parent=222 // loop_header_branch
              %528 = sbr.rel (%p526) target = $region230
            $region227: #{tpu_custom_call.1} parent=222 // loop_body
              %v532 = vld [vmem:[%s530] sm:%s523]
              %533 = vst [vmem:[%s531] sm:%s523] %v532
            $region228: #{tpu_custom_call.1} parent=222 // loop_footer
              %s529 = sadd.s32 1, %s525
            $region229: #{tpu_custom_call.1} parent=222 // loop_footer_branch
              %524 = sbr.rel target = $region225
            $region230: #{tpu_custom_call.1} parent=222 // loop_exit
              _
          $region223: #{tpu_custom_call.1} parent=207 // pred_fallthru
            _
        $region208: #{tpu_custom_call.1} parent=23 // pred_fallthru
          _
        // Predicated region
        $region209: #{tpu_custom_call.1} parent=23 // pred_check
          %p497 = pneg %p493
        $region210: #{tpu_custom_call.1} parent=23 // pred_check_branch
          %499 = sbr.rel (%p497) target = $region212
        $region211: #{tpu_custom_call.1} parent=23 // pred_region
          %s500 = sshll.u32 1, 1
          %s501 = ssub.s32 %s500, 1
          loop: start=0, step=1, limit=1
          $region213: #{tpu_custom_call.1} parent=211 // loop_pre_header
            _
          $region214: #{tpu_custom_call.1} parent=211 // loop_header
            %s503 = sphi 0, %s507
            %p504 = scmp.ge.s32.totalorder %s503, 1
            %s508 = sphi %s489, %s489
            %s509 = sphi %s490, %s490
          $region215: #{tpu_custom_call.1} parent=211 // loop_header_branch
            %506 = sbr.rel (%p504) target = $region219
          $region216: #{tpu_custom_call.1} parent=211 // loop_body
            %v510 = vld [vmem:[%s508] sm:%s501]
            %511 = vst [vmem:[%s509] sm:%s501] %v510
          $region217: #{tpu_custom_call.1} parent=211 // loop_footer
            %s507 = sadd.s32 1, %s503
          $region218: #{tpu_custom_call.1} parent=211 // loop_footer_branch
            %502 = sbr.rel target = $region214
          $region219: #{tpu_custom_call.1} parent=211 // loop_exit
            _
        $region212: #{tpu_custom_call.1} parent=23 // pred_fallthru
          _
        // Predicated region
        $region231: #{tpu_custom_call.1} parent=23 // pred_check
          _
        $region232: #{tpu_custom_call.1} parent=23 // pred_check_branch
          %536 = sbr.rel (0) target = $region234
        $region233: #{tpu_custom_call.1} parent=23 // pred_region
          %537 = vsyncadd %s491, 16
        $region234: #{tpu_custom_call.1} parent=23 // pred_fallthru
          _
        %s538 = sadd.s32 %s134, 7
        %s539 = sshra.s32 %s538, 7
        %s540 = sand.u32 %s538, 127
        %s541 = sadd.s32 %s539, %s27
        %s542 = smul.u32 %s541, 128
        %s543 = sshra.s32 %s538, 7
        %s544 = sand.u32 %s538, 127
        %s545 = sadd.s32 %s542, %s544
        %s546 = sld [smem:[#allocation5 + %s545]]
        %s547 = scalar_lea.vmem %s1, %s546
        %s548 = scalar_lea.vmem [#allocation2], 7
        %s549 = scalar_lea.sflag [#allocation3], 7
        %p551 = scmp.lt.u32.totalorder 1, 8
        %p552 = pneg %p551
        // Predicated region
        $region235: #{tpu_custom_call.1} parent=23 // pred_check
          _
        $region236: #{tpu_custom_call.1} parent=23 // pred_check_branch
          %554 = sbr.rel (%p551) target = $region238
        $region237: #{tpu_custom_call.1} parent=23 // pred_region
          %s570 = sand.u32 1, 7
          %p571 = scmp.eq.s32.totalorder %s570, 0
          %p572 = pneg %p571
          // Predicated region
          $region250: #{tpu_custom_call.1} parent=237 // pred_check
            _
          $region251: #{tpu_custom_call.1} parent=237 // pred_check_branch
            %574 = sbr.rel (%p571) target = $region253
          $region252: #{tpu_custom_call.1} parent=237 // pred_region
            %s575 = sand.u32 1, 7
            %s576 = ssub.s32 1, %s575
            %s577 = scalar_lea.vmem %s547, %s576
            %s578 = ssub.s32 1, %s575
            %s579 = scalar_lea.vmem %s548, %s578 [#allocation2]
            %s580 = sshll.u32 1, %s575
            %s581 = ssub.s32 %s580, 1
            loop: start=0, step=1, limit=1
            $region254: #{tpu_custom_call.1} parent=252 // loop_pre_header
              _
            $region255: #{tpu_custom_call.1} parent=252 // loop_header
              %s583 = sphi 0, %s587
              %p584 = scmp.ge.s32.totalorder %s583, 1
              %s588 = sphi %s577, %s577
              %s589 = sphi %s579, %s579
            $region256: #{tpu_custom_call.1} parent=252 // loop_header_branch
              %586 = sbr.rel (%p584) target = $region260
            $region257: #{tpu_custom_call.1} parent=252 // loop_body
              %v590 = vld [vmem:[%s588] sm:%s581]
              %591 = vst [vmem:[%s589] sm:%s581] %v590
            $region258: #{tpu_custom_call.1} parent=252 // loop_footer
              %s587 = sadd.s32 1, %s583
            $region259: #{tpu_custom_call.1} parent=252 // loop_footer_branch
              %582 = sbr.rel target = $region255
            $region260: #{tpu_custom_call.1} parent=252 // loop_exit
              _
          $region253: #{tpu_custom_call.1} parent=237 // pred_fallthru
            _
        $region238: #{tpu_custom_call.1} parent=23 // pred_fallthru
          _
        // Predicated region
        $region239: #{tpu_custom_call.1} parent=23 // pred_check
          %p555 = pneg %p551
        $region240: #{tpu_custom_call.1} parent=23 // pred_check_branch
          %557 = sbr.rel (%p555) target = $region242
        $region241: #{tpu_custom_call.1} parent=23 // pred_region
          %s558 = sshll.u32 1, 1
          %s559 = ssub.s32 %s558, 1
          loop: start=0, step=1, limit=1
          $region243: #{tpu_custom_call.1} parent=241 // loop_pre_header
            _
          $region244: #{tpu_custom_call.1} parent=241 // loop_header
            %s561 = sphi 0, %s565
            %p562 = scmp.ge.s32.totalorder %s561, 1
            %s566 = sphi %s547, %s547
            %s567 = sphi %s548, %s548
          $region245: #{tpu_custom_call.1} parent=241 // loop_header_branch
            %564 = sbr.rel (%p562) target = $region249
          $region246: #{tpu_custom_call.1} parent=241 // loop_body
            %v568 = vld [vmem:[%s566] sm:%s559]
            %569 = vst [vmem:[%s567] sm:%s559] %v568
          $region247: #{tpu_custom_call.1} parent=241 // loop_footer
            %s565 = sadd.s32 1, %s561
          $region248: #{tpu_custom_call.1} parent=241 // loop_footer_branch
            %560 = sbr.rel target = $region244
          $region249: #{tpu_custom_call.1} parent=241 // loop_exit
            _
        $region242: #{tpu_custom_call.1} parent=23 // pred_fallthru
          _
        // Predicated region
        $region261: #{tpu_custom_call.1} parent=23 // pred_check
          _
        $region262: #{tpu_custom_call.1} parent=23 // pred_check_branch
          %594 = sbr.rel (0) target = $region264
        $region263: #{tpu_custom_call.1} parent=23 // pred_region
          %595 = vsyncadd %s549, 16
        $region264: #{tpu_custom_call.1} parent=23 // pred_fallthru
          _
        %s596 = smul.u32 1, 1
        %s597 = sshll.u32 %s596, 4
        %598 = dma.done [#allocation3], %s597
        %s599 = sshll.u32 %s596, 4
        %600 = dma.done %s201, %s599
        %s601 = sshll.u32 %s596, 4
        %602 = dma.done %s259, %s601
        %s603 = sshll.u32 %s596, 4
        %604 = dma.done %s317, %s603
        %s605 = sshll.u32 %s596, 4
        %606 = dma.done %s375, %s605
        %s607 = sshll.u32 %s596, 4
        %608 = dma.done %s433, %s607
        %s609 = sshll.u32 %s596, 4
        %610 = dma.done %s491, %s609
        %s611 = sshll.u32 %s596, 4
        %612 = dma.done %s549, %s611
        %v613 = vld [vmem:[#allocation2] sm:$0xff]
        %v614 = vld [vmem:[%s133] sm:$0xff]
        %v615 = vadd.f32 %v613, %v614
        %vm616 = vcmask 261120
        %617 = vst.msk [vmem:[%s129] sm:$0xff] %vm616, %v615
        %s618 = sand.u32 %s71, 1
        %s619 = scalar_lea.sflag [#allocation7], %s618
        %s620 = sand.u32 %s71, 1
        %s621 = smul.addr %s620, 8
        %s622 = scalar_lea.vmem [#allocation6], %s621
        // Predicated region
        $region265: #{tpu_custom_call.1} parent=23 // pred_check
          %p623 = pneg %p81
        $region266: #{tpu_custom_call.1} parent=23 // pred_check_branch
          %625 = sbr.rel (%p623) target = $region268
        $region267: #{tpu_custom_call.1} parent=23 // pred_region
          %s627 = ssub.s32 128, 128
          %628 = vsyncadd %s619, %s627
          %s629 = sadd.s32 %s28, %s27
          %s630 = smul.addr %s629, 128
          %s631 = scalar_lea.hbm %s3, %s630
          %s633 = sshll.u32 %s622, 4
          %s634 = int_to_ptr.vmem [resolvable:$true] %s633
          %636 = dma.vmem_to_hbm [thread:$0]  %s634, 128, %s631, %s619
        $region268: #{tpu_custom_call.1} parent=23 // pred_fallthru
          _
      $region24: #{tpu_custom_call.1} parent=5 // pred_fallthru
        _
      %p637 = scmp.le.s32.totalorder 2, %s18
      // Predicated region
      $region269: #{tpu_custom_call.1} parent=5 // pred_check
        %p638 = pneg %p637
      $region270: #{tpu_custom_call.1} parent=5 // pred_check_branch
        %640 = sbr.rel (%p638) target = $region272
      $region271: #{tpu_custom_call.1} parent=5 // pred_region
        %s641 = ssub.s32 %s18, 2
        // Predicated region
        $region273: #{tpu_custom_call.1} parent=271 // pred_check
          %p642 = pneg %p87
        $region274: #{tpu_custom_call.1} parent=271 // pred_check_branch
          %644 = sbr.rel (%p642) target = $region276
        $region275: #{tpu_custom_call.1} parent=271 // pred_region
          %s645 = sand.u32 %s72, 1
          %s646 = scalar_lea.sflag [#allocation7], %s645
          %s647 = sand.u32 %s72, 1
          %s648 = smul.addr %s647, 8
          %s649 = scalar_lea.vmem [#allocation6], %s648
          %650 = dma.done %s646, 128
        $region276: #{tpu_custom_call.1} parent=271 // pred_fallthru
          _
      $region272: #{tpu_custom_call.1} parent=5 // pred_fallthru
        _
    $region6: #{tpu_custom_call.1} parent=1 // loop_footer
      %s22 = sadd.s32 1, %s18
    $region7: #{tpu_custom_call.1} parent=1 // loop_footer_branch
      %17 = sbr.rel target = $region3
    $region8: #{tpu_custom_call.1} parent=1 // loop_exit
      _
    %651 = vsyncpa [#allocation7], 1
    %s652 = scalar_lea.sflag [#allocation7], 1
    %653 = vsyncpa %s652, 1
  %654 = vsyncmov [#allocation3]
  %s655 = vpop.sfrf %654
  %p656 = scmp.eq.s32.totalorder %s655, 0
  %p657 = pneg %p656
  %659 = shalt.err (%p657)
  %s660 = scalar_lea.sflag [#allocation3], 1
  %661 = vsyncmov %s660
  %s662 = vpop.sfrf %661
  %p663 = scmp.eq.s32.totalorder %s662, 0
  %p664 = pneg %p663
  %666 = shalt.err (%p664)
  %s667 = scalar_lea.sflag [#allocation3], 2
  %668 = vsyncmov %s667
  %s669 = vpop.sfrf %668
  %p670 = scmp.eq.s32.totalorder %s669, 0
  %p671 = pneg %p670
  %673 = shalt.err (%p671)
  %s674 = scalar_lea.sflag [#allocation3], 3
  %675 = vsyncmov %s674
  %s676 = vpop.sfrf %675
  %p677 = scmp.eq.s32.totalorder %s676, 0
  %p678 = pneg %p677
  %680 = shalt.err (%p678)
  %s681 = scalar_lea.sflag [#allocation3], 4
  %682 = vsyncmov %s681
  %s683 = vpop.sfrf %682
  %p684 = scmp.eq.s32.totalorder %s683, 0
  %p685 = pneg %p684
  %687 = shalt.err (%p685)
  %s688 = scalar_lea.sflag [#allocation3], 5
  %689 = vsyncmov %s688
  %s690 = vpop.sfrf %689
  %p691 = scmp.eq.s32.totalorder %s690, 0
  %p692 = pneg %p691
  %694 = shalt.err (%p692)
  %s695 = scalar_lea.sflag [#allocation3], 6
  %696 = vsyncmov %s695
  %s697 = vpop.sfrf %696
  %p698 = scmp.eq.s32.totalorder %s697, 0
  %p699 = pneg %p698
  %701 = shalt.err (%p699)
  %s702 = scalar_lea.sflag [#allocation3], 7
  %703 = vsyncmov %s702
  %s704 = vpop.sfrf %703
  %p705 = scmp.eq.s32.totalorder %s704, 0
  %p706 = pneg %p705
  %708 = shalt.err (%p706)

</llo_original>
